<compile_context>
chip_gen: v6e
topology: v6e:2x2x1
jax: 0.10.0
libtpu: 0.0.40
codegen_flags: <defaults>
</compile_context>

<pallas_src>
import functools

import jax
import jax.numpy as jnp
from jax.experimental import pallas as pl
from jax.experimental.pallas import tpu as pltpu


def _round_up(x, m):
    return ((x + m - 1) // m) * m


def _cdiv(a, b):
    return -(-a // b)


def _pick_tile(n, tile):
    """Lane tile (multiple of 128) and padded extent, balanced across tiles."""
    n128 = _round_up(max(n, 1), 128)
    t = min(_round_up(max(tile, 128), 128), n128)
    nt = _cdiv(n128, t)
    t = _round_up(_cdiv(n128, nt), 128)
    return t, nt * t


def _nn_dist_kernel(x1_ref, x2_ref, o_ref, acc_ref, *, chunk, matmul_dtype):
    """Grid point (b, i, k): fold xyz2 tile k into the running max of
    s_ij = <x1_i, x2_j> - 0.5*||x2_j||^2 for xyz1 tile i."""
    k = pl.program_id(2)

    @pl.when(k == 0)
    def _init():
        acc_ref[...] = jnp.full(acc_ref.shape, -jnp.inf, dtype=acc_ref.dtype)

    lhs = x1_ref[0].astype(matmul_dtype)  # (4, tn1): rows [x, y, z, 1]
    tn2 = x2_ref.shape[2]

    # Chunk the N2 tile so each matmul result is folded into the accumulator
    # immediately and the (tn1, tn2) intermediate never hits VMEM.
    for c in range(tn2 // chunk):
        rhs = x2_ref[0, :, c * chunk:(c + 1) * chunk].astype(matmul_dtype)  # (4, chunk)
        # (chunk, tn1) = <x2_j, x1_i> + 1 * (-0.5*||x2_j||^2)  -- one K=4 MXU matmul.
        s = jax.lax.dot_general(
            rhs, lhs,
            dimension_numbers=(((0,), (0,)), ((), ())),
            preferred_element_type=jnp.float32,
        )
        # VPU max-fold of the chunk down to 8 sublanes (vreg-aligned slices),
        # then a single 1-vreg RMW of the VMEM accumulator.
        m = s[0:8]
        for j in range(1, chunk // 8):
            m = jnp.maximum(m, s[j * 8:(j + 1) * 8])
        acc_ref[...] = jnp.maximum(acc_ref[...], m)

    @pl.when(k == pl.num_programs(2) - 1)
    def _finalize():
        x1 = x1_ref[0]  # f32 (4, tn1); rows 0..2 are the raw coordinates
        sq1 = x1[0:1] * x1[0:1] + x1[1:2] * x1[1:2] + x1[2:3] * x1[2:3]  # (1, tn1)
        best = jnp.max(acc_ref[...], axis=0, keepdims=True)              # (1, tn1)
        # min_j ||x1-x2||^2 = ||x1||^2 - 2*max_j s_ij ; clamp only the minimum.
        o_ref[0] = jnp.sqrt(jnp.maximum(sq1 - 2.0 * best, 0.0))


def nearest_neighbor_dist(xyz1, xyz2, *, tile_n1=128, tile_n2=4096, chunk_n2=256,
                          use_bf16_matmul=False, vmem_limit_bytes=None):
    """dist[b, i] = sqrt(min_j ||xyz1[b,i] - xyz2[b,j]||^2), shape (B, N1)."""
    assert xyz1.ndim == 3 and xyz2.ndim == 3
    assert xyz1.shape[-1] == 3 and xyz2.shape[-1] == 3
    B, N1, _ = xyz1.shape
    B2, N2, _ = xyz2.shape
    assert B == B2
    xyz1 = xyz1.astype(jnp.float32)
    xyz2 = xyz2.astype(jnp.float32)

    # ---- tile selection ------------------------------------------------
    tn1, n1p = _pick_tile(N1, tile_n1)
    # v7x megacore occupancy: keep >= 2 parallel (b, i) tiles when possible.
    if B * (n1p // tn1) < 2 and n1p >= 256:
        tn1, n1p = _pick_tile(N1, max(128, n1p // 2))
    tn2, n2p = _pick_tile(N2, tile_n2)

    chunk = min(_round_up(chunk_n2, 128), tn2)
    while tn2 % chunk:
        chunk -= 128

    # ---- pad by replicating a real point (duplicates never change a min) ---
    if n1p != N1:
        xyz1 = jnp.concatenate(
            [xyz1, jnp.broadcast_to(xyz1[:, :1, :], (B, n1p - N1, 3))], axis=1)
    if n2p != N2:
        xyz2 = jnp.concatenate(
            [xyz2, jnp.broadcast_to(xyz2[:, :1, :], (B, n2p - N2, 3))], axis=1)

    # ---- K=4 augmented, lane-dense (B, 4, N) layout (layout plumbing + a
    # genuine hoist of ||x2||^2 out of the per-(b,i)-tile loop) --------------
    x1a = jnp.concatenate(
        [jnp.transpose(xyz1, (0, 2, 1)),
         jnp.ones((B, 1, n1p), jnp.float32)], axis=1)                     # (B,4,n1p)
    x2a = jnp.concatenate(
        [jnp.transpose(xyz2, (0, 2, 1)),
         (-0.5) * jnp.sum(xyz2 * xyz2, axis=2)[:, None, :]], axis=1)      # (B,4,n2p)

    matmul_dtype = jnp.bfloat16 if use_bf16_matmul else jnp.float32
    grid = (B, n1p // tn1, n2p // tn2)
    kernel = functools.partial(_nn_dist_kernel, chunk=chunk, matmul_dtype=matmul_dtype)

    cost = pl.CostEstimate(
        flops=int(2 * B * n1p * n2p * 4 + B * n1p * n2p),
        transcendentals=int(B * n1p),
        bytes_accessed=int(x1a.size * 4 + x2a.size * 4 + B * n1p * 4),
    )

    out = pl.pallas_call(
        kernel,
        out_shape=jax.ShapeDtypeStruct((B, 1, n1p), jnp.float32),
        grid_spec=pltpu.PrefetchScalarGridSpec(
            num_scalar_prefetch=0,
            grid=grid,
            in_specs=[
                pl.BlockSpec((1, 4, tn1), lambda b, i, k: (b, 0, i)),
                pl.BlockSpec((1, 4, tn2), lambda b, i, k: (b, 0, k)),
            ],
            out_specs=pl.BlockSpec((1, 1, tn1), lambda b, i, k: (b, 0, i)),
            scratch_shapes=[pltpu.VMEM((8, tn1), jnp.float32)],
        ),
        compiler_params=pltpu.CompilerParams(
            dimension_semantics=("parallel", "parallel", "arbitrary"),
            vmem_limit_bytes=vmem_limit_bytes,
        ),
        cost_estimate=cost,
    )(x1a, x2a)
    return out[:, 0, :N1]  # drop padded xyz1 rows


def partial_chamfer_distance_l1(xyz1, xyz2, weights1=None, ignore_zeros=False,
                                **kernel_kwargs):
    """Matches PatialChamferDistanceL1.forward semantics (scalar output)."""
    B = xyz1.shape[0]
    if ignore_zeros and B == 1:
        # Static-shape emulation of the dynamic boolean filtering: zero xyz2
        # points are pushed far away (never the nearest neighbour) and zero
        # xyz1 points are excluded from the (weighted) mean via a mask.
        # 1e9 sentinel is safe in f32 and bf16 (same exponent range); do not
        # switch the distance math to fp16.
        # TODO(synk): if *all* xyz2 points are zero this differs from the
        # PyTorch path (which would index an empty tensor).
        nz1 = jnp.sum(xyz1, axis=2) != 0
        nz2 = jnp.sum(xyz2, axis=2) != 0
        xyz2 = jnp.where(nz2[..., None], xyz2, jnp.float32(1e9))
        dist1 = nearest_neighbor_dist(xyz1, xyz2, **kernel_kwargs)
        mask = nz1.astype(dist1.dtype)
        if weights1 is not None:
            if weights1.ndim == 3 and weights1.shape[2] == 1:
                weights1 = weights1[..., 0]
            w = weights1 * mask
            return jnp.sum(dist1 * w) / jnp.sum(w)
        return jnp.sum(dist1 * mask) / jnp.sum(mask)

    dist1 = nearest_neighbor_dist(xyz1, xyz2, **kernel_kwargs)  # (B, N1), sqrt'd
    if weights1 is not None:
        if weights1.ndim == 3 and weights1.shape[2] == 1:
            weights1 = weights1[..., 0]
        dist1 = dist1 * weights1
        return jnp.sum(dist1) / jnp.sum(weights1)
    return jnp.mean(dist1)


def _reference(xyz1, xyz2, weights1=None):
    d2 = jnp.sum((xyz1[:, :, None, :] - xyz2[:, None, :, :]) ** 2, axis=-1)
    d = jnp.sqrt(jnp.min(d2, axis=-1))
    if weights1 is not None:
        return jnp.sum(d * weights1) / jnp.sum(weights1)
    return jnp.mean(d)


if __name__ == "__main__":
    key = jax.random.PRNGKey(0)
    k1, k2, k3 = jax.random.split(key, 3)

    # Non-multiple-of-tile sizes exercise the padding path.
    B, N1, N2 = 2, 100, 200
    xyz1 = jax.random.normal(k1, (B, N1, 3), dtype=jnp.float32)
    xyz2 = jax.random.normal(k2, (B, N2, 3), dtype=jnp.float32)
    weights1 = jax.random.uniform(k3, (B, N1), dtype=jnp.float32)

    # Unweighted, f32 MXU operands (strict accuracy).
    out = jax.block_until_ready(partial_chamfer_distance_l1(xyz1, xyz2))
    ref = _reference(xyz1, xyz2)
    assert jnp.allclose(out, ref, rtol=1e-3, atol=1e-3), (out, ref)

    # Weighted variant.
    out_w = jax.block_until_ready(
        partial_chamfer_distance_l1(xyz1, xyz2, weights1=weights1))
    ref_w = _reference(xyz1, xyz2, weights1)
    assert jnp.allclose(out_w, ref_w, rtol=1e-3, atol=1e-3), (out_w, ref_w)

    # bf16 MXU operands (~3x fewer vmatmul passes); accuracy-gated at a looser
    # tolerance because of cancellation in the ||.||^2 expansion near d ~ 0.
    out_bf16 = jax.block_until_ready(
        partial_chamfer_distance_l1(xyz1, xyz2, use_bf16_matmul=True))
    assert jnp.allclose(out_bf16, ref, rtol=5e-2, atol=5e-2), (out_bf16, ref)

    # ignore_zeros path (batch size 1), checked against an explicitly filtered reference.
    xyz1z = jax.random.normal(jax.random.PRNGKey(1), (1, 64, 3), dtype=jnp.float32)
    xyz2z = jax.random.normal(jax.random.PRNGKey(2), (1, 80, 3), dtype=jnp.float32)
    xyz1z = xyz1z.at[0, ::7].set(0.0)
    xyz2z = xyz2z.at[0, ::5].set(0.0)
    out_z = jax.block_until_ready(
        partial_chamfer_distance_l1(xyz1z, xyz2z, ignore_zeros=True))
    m1 = jnp.sum(xyz1z[0], axis=1) != 0
    m2 = jnp.sum(xyz2z[0], axis=1) != 0
    ref_z = _reference(xyz1z[:, m1], xyz2z[:, m2])
    assert jnp.allclose(out_z, ref_z, rtol=1e-3, atol=1e-3), (out_z, ref_z)

    print("KERNEL_OK")
</pallas_src>

<mosaic_0001>
module attributes {stable_mosaic.version = 11 : i64} {
  func.func @_nn_dist_kernel(%arg0: i32, %arg1: i32, %arg2: i32, %arg3: memref<1x4x128xf32, #tpu.memory_space<vmem>>, %arg4: memref<1x4x256xf32, #tpu.memory_space<vmem>>, %arg5: memref<1x1x128xf32, #tpu.memory_space<vmem>>, %arg6: memref<8x128xf32, #tpu.memory_space<vmem>>) attributes {dimension_semantics = [#tpu.dimension_semantics<parallel>, #tpu.dimension_semantics<parallel>, #tpu.dimension_semantics<arbitrary>], iteration_bounds = array<i64: 2, 1, 1>, scalar_prefetch = 0 : i64, scratch_operands = 1 : i64, tpu.core_type = #tpu.core_type<tc>, window_params = [{transform_indices = @transform_0, window_bounds = array<i64: 1, 4, 128>}, {transform_indices = @transform_1, window_bounds = array<i64: 1, 4, 256>}, {transform_indices = @transform_2, window_bounds = array<i64: 1, 1, 128>}]} {
    %c0_i32 = arith.constant 0 : i32
    %0 = arith.cmpi eq, %arg2, %c0_i32 : i32
    %1 = arith.extui %0 : i1 to i32
    %c0_i32_0 = arith.constant 0 : i32
    %2 = arith.cmpi ne, %1, %c0_i32_0 : i32
    scf.if %2 {
      %cst_12 = arith.constant 0xFF800000 : f32
      %77 = vector.broadcast %cst_12 : f32 to vector<8x128xf32>
      %c0_13 = arith.constant 0 : index
      %c0_14 = arith.constant 0 : index
      %78 = vector.load %arg6[%c0_13, %c0_14] : memref<8x128xf32, #tpu.memory_space<vmem>>, vector<8x128xf32>
      tpu.vector_store %arg6[%c0_13, %c0_14], %77 {strides = array<i32>} : memref<8x128xf32, #tpu.memory_space<vmem>>, vector<8x128xf32>,
    } else {
    }
    %c0 = arith.constant 0 : index
    %c0_1 = arith.constant 0 : index
    %c0_2 = arith.constant 0 : index
    %3 = vector.load %arg3[%c0, %c0_1, %c0_2] : memref<1x4x128xf32, #tpu.memory_space<vmem>>, vector<1x4x128xf32>
    %4 = vector.shape_cast %3 : vector<1x4x128xf32> to vector<4x128xf32>
    %c0_3 = arith.constant 0 : index
    %c0_4 = arith.constant 0 : index
    %c0_5 = arith.constant 0 : index
    %5 = vector.load %arg4[%c0_3, %c0_4, %c0_5] : memref<1x4x256xf32, #tpu.memory_space<vmem>>, vector<1x4x256xf32>
    %6 = vector.shape_cast %5 : vector<1x4x256xf32> to vector<4x256xf32>
    %cst = arith.constant dense<0.000000e+00> : vector<256x128xf32>
    %7 = tpu.matmul %6, %4, %cst {dimension_numbers = #tpu.dot_dimension_numbers<[0], [0], [1], [1], [0, 1, 1, 1], [], []>} : vector<4x256xf32>, vector<4x128xf32>, vector<256x128xf32> -> vector<256x128xf32>
    %8 = vector.extract_strided_slice %7 {offsets = [0, 0], sizes = [8, 128], strides = [1, 1]} : vector<256x128xf32> to vector<8x128xf32>
    %9 = vector.extract_strided_slice %7 {offsets = [8, 0], sizes = [8, 128], strides = [1, 1]} : vector<256x128xf32> to vector<8x128xf32>
    %10 = arith.maximumf %8, %9 : vector<8x128xf32>
    %11 = vector.extract_strided_slice %7 {offsets = [16, 0], sizes = [8, 128], strides = [1, 1]} : vector<256x128xf32> to vector<8x128xf32>
    %12 = arith.maximumf %10, %11 : vector<8x128xf32>
    %13 = vector.extract_strided_slice %7 {offsets = [24, 0], sizes = [8, 128], strides = [1, 1]} : vector<256x128xf32> to vector<8x128xf32>
    %14 = arith.maximumf %12, %13 : vector<8x128xf32>
    %15 = vector.extract_strided_slice %7 {offsets = [32, 0], sizes = [8, 128], strides = [1, 1]} : vector<256x128xf32> to vector<8x128xf32>
    %16 = arith.maximumf %14, %15 : vector<8x128xf32>
    %17 = vector.extract_strided_slice %7 {offsets = [40, 0], sizes = [8, 128], strides = [1, 1]} : vector<256x128xf32> to vector<8x128xf32>
    %18 = arith.maximumf %16, %17 : vector<8x128xf32>
    %19 = vector.extract_strided_slice %7 {offsets = [48, 0], sizes = [8, 128], strides = [1, 1]} : vector<256x128xf32> to vector<8x128xf32>
    %20 = arith.maximumf %18, %19 : vector<8x128xf32>
    %21 = vector.extract_strided_slice %7 {offsets = [56, 0], sizes = [8, 128], strides = [1, 1]} : vector<256x128xf32> to vector<8x128xf32>
    %22 = arith.maximumf %20, %21 : vector<8x128xf32>
    %23 = vector.extract_strided_slice %7 {offsets = [64, 0], sizes = [8, 128], strides = [1, 1]} : vector<256x128xf32> to vector<8x128xf32>
    %24 = arith.maximumf %22, %23 : vector<8x128xf32>
    %25 = vector.extract_strided_slice %7 {offsets = [72, 0], sizes = [8, 128], strides = [1, 1]} : vector<256x128xf32> to vector<8x128xf32>
    %26 = arith.maximumf %24, %25 : vector<8x128xf32>
    %27 = vector.extract_strided_slice %7 {offsets = [80, 0], sizes = [8, 128], strides = [1, 1]} : vector<256x128xf32> to vector<8x128xf32>
    %28 = arith.maximumf %26, %27 : vector<8x128xf32>
    %29 = vector.extract_strided_slice %7 {offsets = [88, 0], sizes = [8, 128], strides = [1, 1]} : vector<256x128xf32> to vector<8x128xf32>
    %30 = arith.maximumf %28, %29 : vector<8x128xf32>
    %31 = vector.extract_strided_slice %7 {offsets = [96, 0], sizes = [8, 128], strides = [1, 1]} : vector<256x128xf32> to vector<8x128xf32>
    %32 = arith.maximumf %30, %31 : vector<8x128xf32>
    %33 = vector.extract_strided_slice %7 {offsets = [104, 0], sizes = [8, 128], strides = [1, 1]} : vector<256x128xf32> to vector<8x128xf32>
    %34 = arith.maximumf %32, %33 : vector<8x128xf32>
    %35 = vector.extract_strided_slice %7 {offsets = [112, 0], sizes = [8, 128], strides = [1, 1]} : vector<256x128xf32> to vector<8x128xf32>
    %36 = arith.maximumf %34, %35 : vector<8x128xf32>
    %37 = vector.extract_strided_slice %7 {offsets = [120, 0], sizes = [8, 128], strides = [1, 1]} : vector<256x128xf32> to vector<8x128xf32>
    %38 = arith.maximumf %36, %37 : vector<8x128xf32>
    %39 = vector.extract_strided_slice %7 {offsets = [128, 0], sizes = [8, 128], strides = [1, 1]} : vector<256x128xf32> to vector<8x128xf32>
    %40 = arith.maximumf %38, %39 : vector<8x128xf32>
    %41 = vector.extract_strided_slice %7 {offsets = [136, 0], sizes = [8, 128], strides = [1, 1]} : vector<256x128xf32> to vector<8x128xf32>
    %42 = arith.maximumf %40, %41 : vector<8x128xf32>
    %43 = vector.extract_strided_slice %7 {offsets = [144, 0], sizes = [8, 128], strides = [1, 1]} : vector<256x128xf32> to vector<8x128xf32>
    %44 = arith.maximumf %42, %43 : vector<8x128xf32>
    %45 = vector.extract_strided_slice %7 {offsets = [152, 0], sizes = [8, 128], strides = [1, 1]} : vector<256x128xf32> to vector<8x128xf32>
    %46 = arith.maximumf %44, %45 : vector<8x128xf32>
    %47 = vector.extract_strided_slice %7 {offsets = [160, 0], sizes = [8, 128], strides = [1, 1]} : vector<256x128xf32> to vector<8x128xf32>
    %48 = arith.maximumf %46, %47 : vector<8x128xf32>
    %49 = vector.extract_strided_slice %7 {offsets = [168, 0], sizes = [8, 128], strides = [1, 1]} : vector<256x128xf32> to vector<8x128xf32>
    %50 = arith.maximumf %48, %49 : vector<8x128xf32>
    %51 = vector.extract_strided_slice %7 {offsets = [176, 0], sizes = [8, 128], strides = [1, 1]} : vector<256x128xf32> to vector<8x128xf32>
    %52 = arith.maximumf %50, %51 : vector<8x128xf32>
    %53 = vector.extract_strided_slice %7 {offsets = [184, 0], sizes = [8, 128], strides = [1, 1]} : vector<256x128xf32> to vector<8x128xf32>
    %54 = arith.maximumf %52, %53 : vector<8x128xf32>
    %55 = vector.extract_strided_slice %7 {offsets = [192, 0], sizes = [8, 128], strides = [1, 1]} : vector<256x128xf32> to vector<8x128xf32>
    %56 = arith.maximumf %54, %55 : vector<8x128xf32>
    %57 = vector.extract_strided_slice %7 {offsets = [200, 0], sizes = [8, 128], strides = [1, 1]} : vector<256x128xf32> to vector<8x128xf32>
    %58 = arith.maximumf %56, %57 : vector<8x128xf32>
    %59 = vector.extract_strided_slice %7 {offsets = [208, 0], sizes = [8, 128], strides = [1, 1]} : vector<256x128xf32> to vector<8x128xf32>
    %60 = arith.maximumf %58, %59 : vector<8x128xf32>
    %61 = vector.extract_strided_slice %7 {offsets = [216, 0], sizes = [8, 128], strides = [1, 1]} : vector<256x128xf32> to vector<8x128xf32>
    %62 = arith.maximumf %60, %61 : vector<8x128xf32>
    %63 = vector.extract_strided_slice %7 {offsets = [224, 0], sizes = [8, 128], strides = [1, 1]} : vector<256x128xf32> to vector<8x128xf32>
    %64 = arith.maximumf %62, %63 : vector<8x128xf32>
    %65 = vector.extract_strided_slice %7 {offsets = [232, 0], sizes = [8, 128], strides = [1, 1]} : vector<256x128xf32> to vector<8x128xf32>
    %66 = arith.maximumf %64, %65 : vector<8x128xf32>
    %67 = vector.extract_strided_slice %7 {offsets = [240, 0], sizes = [8, 128], strides = [1, 1]} : vector<256x128xf32> to vector<8x128xf32>
    %68 = arith.maximumf %66, %67 : vector<8x128xf32>
    %69 = vector.extract_strided_slice %7 {offsets = [248, 0], sizes = [8, 128], strides = [1, 1]} : vector<256x128xf32> to vector<8x128xf32>
    %70 = arith.maximumf %68, %69 : vector<8x128xf32>
    %c0_6 = arith.constant 0 : index
    %c0_7 = arith.constant 0 : index
    %71 = vector.load %arg6[%c0_6, %c0_7] : memref<8x128xf32, #tpu.memory_space<vmem>>, vector<8x128xf32>
    %72 = arith.maximumf %71, %70 : vector<8x128xf32>
    %c0_8 = arith.constant 0 : index
    %c0_9 = arith.constant 0 : index
    %73 = vector.load %arg6[%c0_8, %c0_9] : memref<8x128xf32, #tpu.memory_space<vmem>>, vector<8x128xf32>
    tpu.vector_store %arg6[%c0_8, %c0_9], %72 {strides = array<i32>} : memref<8x128xf32, #tpu.memory_space<vmem>>, vector<8x128xf32>,
    %c0_i32_10 = arith.constant 0 : i32
    %74 = arith.cmpi eq, %arg2, %c0_i32_10 : i32
    %75 = arith.extui %74 : i1 to i32
    %c0_i32_11 = arith.constant 0 : i32
    %76 = arith.cmpi ne, %75, %c0_i32_11 : i32
    scf.if %76 {
      %c0_12 = arith.constant 0 : index
      %c0_13 = arith.constant 0 : index
      %c0_14 = arith.constant 0 : index
      %77 = vector.load %arg3[%c0_12, %c0_13, %c0_14] : memref<1x4x128xf32, #tpu.memory_space<vmem>>, vector<1x4x128xf32>
      %78 = vector.shape_cast %77 : vector<1x4x128xf32> to vector<4x128xf32>
      %79 = vector.extract_strided_slice %78 {offsets = [0, 0], sizes = [1, 128], strides = [1, 1]} : vector<4x128xf32> to vector<1x128xf32>
      %80 = vector.extract_strided_slice %78 {offsets = [0, 0], sizes = [1, 128], strides = [1, 1]} : vector<4x128xf32> to vector<1x128xf32>
      %81 = arith.mulf %79, %80 : vector<1x128xf32>
      %82 = vector.extract_strided_slice %78 {offsets = [1, 0], sizes = [1, 128], strides = [1, 1]} : vector<4x128xf32> to vector<1x128xf32>
      %83 = vector.extract_strided_slice %78 {offsets = [1, 0], sizes = [1, 128], strides = [1, 1]} : vector<4x128xf32> to vector<1x128xf32>
      %84 = arith.mulf %82, %83 : vector<1x128xf32>
      %85 = arith.addf %81, %84 : vector<1x128xf32>
      %86 = vector.extract_strided_slice %78 {offsets = [2, 0], sizes = [1, 128], strides = [1, 1]} : vector<4x128xf32> to vector<1x128xf32>
      %87 = vector.extract_strided_slice %78 {offsets = [2, 0], sizes = [1, 128], strides = [1, 1]} : vector<4x128xf32> to vector<1x128xf32>
      %88 = arith.mulf %86, %87 : vector<1x128xf32>
      %89 = arith.addf %85, %88 : vector<1x128xf32>
      %c0_15 = arith.constant 0 : index
      %c0_16 = arith.constant 0 : index
      %90 = vector.load %arg6[%c0_15, %c0_16] : memref<8x128xf32, #tpu.memory_space<vmem>>, vector<8x128xf32>
      %cst_17 = arith.constant dense<0xFF800000> : vector<128xf32>
      %91 = vector.multi_reduction <maximumf>, %90, %cst_17 [0] : vector<8x128xf32> to vector<128xf32>
      %92 = vector.shape_cast %91 : vector<128xf32> to vector<1x128xf32>
      %cst_18 = arith.constant 2.000000e+00 : f32
      %93 = vector.broadcast %cst_18 : f32 to vector<1x128xf32>
      %94 = arith.mulf %93, %92 : vector<1x128xf32>
      %95 = arith.subf %89, %94 : vector<1x128xf32>
      %cst_19 = arith.constant 0.000000e+00 : f32
      %96 = vector.broadcast %cst_19 : f32 to vector<1x128xf32>
      %97 = arith.maximumf %95, %96 : vector<1x128xf32>
      %98 = math.sqrt %97 : vector<1x128xf32>
      %c0_20 = arith.constant 0 : index
      %c0_21 = arith.constant 0 : index
      %c0_22 = arith.constant 0 : index
      %99 = vector.load %arg5[%c0_20, %c0_21, %c0_22] : memref<1x1x128xf32, #tpu.memory_space<vmem>>, vector<1x1x128xf32>
      %100 = vector.shape_cast %99 : vector<1x1x128xf32> to vector<1x128xf32>
      %101 = vector.shape_cast %98 : vector<1x128xf32> to vector<1x1x128xf32>
      tpu.vector_store %arg5[%c0_20, %c0_21, %c0_22], %101 {strides = array<i32>} : memref<1x1x128xf32, #tpu.memory_space<vmem>>, vector<1x1x128xf32>,
    } else {
    }
    return
  }
  func.func @transform_0(%arg0: i32, %arg1: i32, %arg2: i32) -> (i32, i32, i32) {
    %c0_i32 = arith.constant 0 : i32
    %c0_i32_0 = arith.constant 0 : i32
    return %arg0, %c0_i32, %arg1 : i32, i32, i32
  }
  func.func @transform_1(%arg0: i32, %arg1: i32, %arg2: i32) -> (i32, i32, i32) {
    %c0_i32 = arith.constant 0 : i32
    %c0_i32_0 = arith.constant 0 : i32
    return %arg0, %c0_i32, %arg2 : i32, i32, i32
  }
  func.func @transform_2(%arg0: i32, %arg1: i32, %arg2: i32) -> (i32, i32, i32) {
    %c0_i32 = arith.constant 0 : i32
    %c0_i32_0 = arith.constant 0 : i32
    return %arg0, %c0_i32, %arg1 : i32, i32, i32
  }
}

</mosaic_0001>

<llo_original>
// kernel: tpu_custom_call.1
$region0: #{tpu_custom_call.1}
  #allocation0 [shape = 'u32[]', space=smem, size = 0x4, offset = 0x4, fixed_abs, tag = 'smem constant byte address 0x4 - core index']
  #allocation1 [shape = 'u32[144,128]{1,0:T(1,128)}', space=vmem, size = 0x12000, scoped, tag = 'internal scratch']
  #allocation2 [shape = 'f32[8,128]{1,0:T(8,128)}', space=vmem, size = 0x1000, scoped, tag = 'scratch operand']
  %s0 = inlined_call_operand.hbm [shape: f32[2,4,128], index: 0, kind: input, shape index: {}]
  %s1 = inlined_call_operand.hbm [shape: f32[2,4,256], index: 1, kind: input, shape index: {}]
  %s2 = inlined_call_operand.hbm [shape: f32[2,1,128], index: 2, kind: output, shape index: {}]
  %s3 = sld [smem:[#allocation0]]
  $region57: #{tpu_custom_call.1} parent=0
    _
  %s5 = ssub.s32 1, %s3
  %s6 = scalar_select 0, %s5, %s3
  $region1: #{tpu_custom_call.1} parent=0
    #allocation3 [shape = 'u8[4096]{0}', space=vmem, size = 0x1000, scoped, tag = 'input window, operand 0']
    #allocation4 [shape = 's32[2]{0}', space=sflag, size = 0x8, scoped, tag = 'scoped memory for tpu_custom_call.1']
    #allocation5 [shape = 's32[2]{0}', space=sflag, size = 0x8, scoped, tag = 'scoped memory for tpu_custom_call.1']
    #allocation6 [shape = 'u8[8192]{0}', space=vmem, size = 0x2000, scoped, tag = 'input window, operand 1']
    #allocation7 [shape = 's32[2]{0}', space=sflag, size = 0x8, scoped, tag = 'scoped memory for tpu_custom_call.1']
    #allocation8 [shape = 'u8[1024]{0}', space=vmem, size = 0x400, scoped, tag = 'output window, operand 0']
    %7 = vsyncpa [#allocation4], 0
    %s8 = scalar_lea.sflag [#allocation4], 1
    %9 = vsyncpa %s8, 0
    %10 = vsyncpa [#allocation7], 0
    %s11 = scalar_lea.sflag [#allocation7], 1
    %12 = vsyncpa %s11, 0
    %13 = vsyncpa [#allocation5], 0
    %s14 = scalar_lea.sflag [#allocation5], 1
    %15 = vsyncpa %s14, 0
    loop: start=0, step=1, limit=4
    $region2: #{tpu_custom_call.1} parent=1 // loop_pre_header
      _
    $region3: #{tpu_custom_call.1} parent=1 // loop_header
      %s17 = sphi 0, %s21
      %p18 = scmp.ge.s32.totalorder %s17, 4
      %s24 = sphi 0, %s43
      %s25 = sphi 0, %s39
      %s26 = sphi 0, %s35
      %s27 = sphi 0, %s24
      %s28 = sphi 0, %s25
      %s29 = sphi 0, %s26
      %s30 = sphi 0, %s27
      %s31 = sphi 0, %s28
      %s32 = sphi 0, %s29
      %s48 = sphi 0, %s50
      %s51 = sphi 0, %s48
      %s52 = sphi 0, %s51
      %s68 = sphi 0, %s52
      %s76 = sphi 0, %s78
      %s79 = sphi 0, %s76
      %s80 = sphi 0, %s79
      %s96 = sphi 0, %s80
      %s104 = sphi 0, %s106
      %s107 = sphi 0, %s104
      %s108 = sphi 0, %s107
      %s124 = sphi 0, %s108
    $region4: #{tpu_custom_call.1} parent=1 // loop_header_branch
      %20 = sbr.rel (%p18) target = $region8
    $region5: #{tpu_custom_call.1} parent=1 // loop_body
      %s22 = ssub.s32 %s17, 1
      %s23 = ssub.s32 %s17, 2
      %s33 = sadd.s32 1, %s26
      %p34 = scmp.ge.s32.totalorder %s33, 1
      %s35 = scalar_select %p34, 0, %s33
      %s36 = sadd.s32 1, %s25
      %s37 = scalar_select %p34, %s36, %s25
      %p38 = scmp.ge.s32.totalorder %s37, 1
      %s39 = scalar_select %p38, 0, %s37
      %s40 = sadd.s32 1, %s24
      %s41 = scalar_select %p38, %s40, %s24
      %p42 = scmp.ge.s32.totalorder %s41, 2
      %s43 = scalar_select %p42, 0, %s41
      %s44 = ssub.s32 %s24, %s43
      %s45 = ssub.s32 %s25, %s39
      %s46 = sor.u32 %s44, %s45
      %p47 = scmp.eq.s32.totalorder %s46, 0
      %s49 = sadd.s32 %s48, 1
      %s50 = scalar_select %p47, %s48, %s49
      %p53 = pneg %p47
      %p54 = scmp.eq.s32.totalorder %s17, 1
      %p55 = por %p53, %p54
      %p56 = scmp.ne.s32.totalorder %s48, %s51
      %p57 = scmp.eq.s32.totalorder %s17, 0
      %p58 = por %p56, %p57
      %p59 = scmp.ne.s32.totalorder %s48, %s51
      %p60 = scmp.eq.s32.totalorder %s22, 1
      %p61 = por %p59, %p60
      %p62 = scmp.ne.s32.totalorder %s51, %s52
      %p63 = scmp.eq.s32.totalorder %s22, 0
      %p64 = por %p62, %p63
      %p65 = scmp.ne.s32.totalorder %s51, %s52
      %p66 = scmp.eq.s32.totalorder %s23, 1
      %p67 = por %p65, %p66
      %p69 = scmp.ne.s32.totalorder %s52, %s68
      %p70 = scmp.eq.s32.totalorder %s23, 0
      %p71 = por %p69, %p70
      %s72 = ssub.s32 %s24, %s43
      %s73 = ssub.s32 %s26, %s35
      %s74 = sor.u32 %s72, %s73
      %p75 = scmp.eq.s32.totalorder %s74, 0
      %s77 = sadd.s32 %s76, 1
      %s78 = scalar_select %p75, %s76, %s77
      %p81 = pneg %p75
      %p82 = scmp.eq.s32.totalorder %s17, 1
      %p83 = por %p81, %p82
      %p84 = scmp.ne.s32.totalorder %s76, %s79
      %p85 = scmp.eq.s32.totalorder %s17, 0
      %p86 = por %p84, %p85
      %p87 = scmp.ne.s32.totalorder %s76, %s79
      %p88 = scmp.eq.s32.totalorder %s22, 1
      %p89 = por %p87, %p88
      %p90 = scmp.ne.s32.totalorder %s79, %s80
      %p91 = scmp.eq.s32.totalorder %s22, 0
      %p92 = por %p90, %p91
      %p93 = scmp.ne.s32.totalorder %s79, %s80
      %p94 = scmp.eq.s32.totalorder %s23, 1
      %p95 = por %p93, %p94
      %p97 = scmp.ne.s32.totalorder %s80, %s96
      %p98 = scmp.eq.s32.totalorder %s23, 0
      %p99 = por %p97, %p98
      %s100 = ssub.s32 %s24, %s43
      %s101 = ssub.s32 %s25, %s39
      %s102 = sor.u32 %s100, %s101
      %p103 = scmp.eq.s32.totalorder %s102, 0
      %s105 = sadd.s32 %s104, 1
      %s106 = scalar_select %p103, %s104, %s105
      %p109 = pneg %p103
      %p110 = scmp.eq.s32.totalorder %s17, 1
      %p111 = por %p109, %p110
      %p112 = scmp.ne.s32.totalorder %s104, %s107
      %p113 = scmp.eq.s32.totalorder %s17, 0
      %p114 = por %p112, %p113
      %p115 = scmp.ne.s32.totalorder %s104, %s107
      %p116 = scmp.eq.s32.totalorder %s22, 1
      %p117 = por %p115, %p116
      %p118 = scmp.ne.s32.totalorder %s107, %s108
      %p119 = scmp.eq.s32.totalorder %s22, 0
      %p120 = por %p118, %p119
      %p121 = scmp.ne.s32.totalorder %s107, %s108
      %p122 = scmp.eq.s32.totalorder %s23, 1
      %p123 = por %p121, %p122
      %p125 = scmp.ne.s32.totalorder %s108, %s124
      %p126 = scmp.eq.s32.totalorder %s23, 0
      %p127 = por %p125, %p126
      %p128 = scmp.le.s32.totalorder 1, %s17
      %p129 = scmp.lt.s32.totalorder %s17, 3
      %p130 = pnand %p128, %p129
      %p131 = pneg %p130
      // Predicated region
      $region9: #{tpu_custom_call.1} parent=5 // pred_check
        _
      $region10: #{tpu_custom_call.1} parent=5 // pred_check_branch
        %133 = sbr.rel (%p130) target = $region12
      $region11: #{tpu_custom_call.1} parent=5 // pred_region
        %s134 = ssub.s32 %s17, 1
      $region12: #{tpu_custom_call.1} parent=5 // pred_fallthru
        _
      %p135 = scmp.lt.s32.totalorder %s17, 2
      // Predicated region
      $region13: #{tpu_custom_call.1} parent=5 // pred_check
        %p136 = pneg %p135
      $region14: #{tpu_custom_call.1} parent=5 // pred_check_branch
        %138 = sbr.rel (%p136) target = $region16
      $region15: #{tpu_custom_call.1} parent=5 // pred_region
        // Predicated region
        $region17: #{tpu_custom_call.1} parent=15 // pred_check
          %p139 = pneg %p58
        $region18: #{tpu_custom_call.1} parent=15 // pred_check_branch
          %141 = sbr.rel (%p139) target = $region20
        $region19: #{tpu_custom_call.1} parent=15 // pred_region
          %s142 = sand.u32 %s48, 1
          %s143 = scalar_lea.sflag [#allocation4], %s142
          %s144 = sand.u32 %s48, 1
          %s145 = smul.addr %s144, 4
          %s146 = scalar_lea.vmem [#allocation3], %s145
          %s148 = ssub.s32 64, 64
          %149 = vsyncadd %s143, %s148
          %s150 = sadd.s32 %s25, %s24
          %s151 = smul.addr %s150, 64
          %s152 = scalar_lea.hbm %s0, %s151
          %s154 = sshll.u32 %s146, 4
          %s155 = int_to_ptr.vmem [resolvable:$true] %s154
          %157 = dma.hbm_to_vmem [thread:$0]  %s152, 64, %s155, %s143
        $region20: #{tpu_custom_call.1} parent=15 // pred_fallthru
          _
        // Predicated region
        $region21: #{tpu_custom_call.1} parent=15 // pred_check
          %p158 = pneg %p86
        $region22: #{tpu_custom_call.1} parent=15 // pred_check_branch
          %160 = sbr.rel (%p158) target = $region24
        $region23: #{tpu_custom_call.1} parent=15 // pred_region
          %s161 = sand.u32 %s76, 1
          %s162 = scalar_lea.sflag [#allocation7], %s161
          %s163 = sand.u32 %s76, 1
          %s164 = smul.addr %s163, 8
          %s165 = scalar_lea.vmem [#allocation6], %s164
          %s166 = smul.u32 2, %s26
          %s168 = ssub.s32 128, 128
          %169 = vsyncadd %s162, %s168
          %s170 = smul.addr %s24, 2
          %s171 = sadd.s32 %s166, %s170
          %s172 = smul.addr %s171, 64
          %s173 = scalar_lea.hbm %s1, %s172
          %s175 = sshll.u32 %s165, 4
          %s176 = int_to_ptr.vmem [resolvable:$true] %s175
          %178 = dma.hbm_to_vmem [thread:$0]  %s173, 128, %s176, %s162
        $region24: #{tpu_custom_call.1} parent=15 // pred_fallthru
          _
      $region16: #{tpu_custom_call.1} parent=5 // pred_fallthru
        _
      %p179 = scmp.le.s32.totalorder 1, %s17
      %p180 = scmp.lt.s32.totalorder %s17, 3
      %p181 = pnand %p179, %p180
      %p182 = pneg %p181
      // Predicated region
      $region25: #{tpu_custom_call.1} parent=5 // pred_check
        _
      $region26: #{tpu_custom_call.1} parent=5 // pred_check_branch
        %184 = sbr.rel (%p181) target = $region28
      $region27: #{tpu_custom_call.1} parent=5 // pred_region
        %s185 = ssub.s32 %s17, 1
        %s186 = sand.u32 %s51, 1
        %s187 = scalar_lea.sflag [#allocation4], %s186
        %s188 = sand.u32 %s51, 1
        %s189 = smul.addr %s188, 4
        %s190 = scalar_lea.vmem [#allocation3], %s189
        // Predicated region
        $region29: #{tpu_custom_call.1} parent=27 // pred_check
          %p191 = pneg %p64
        $region30: #{tpu_custom_call.1} parent=27 // pred_check_branch
          %193 = sbr.rel (%p191) target = $region32
        $region31: #{tpu_custom_call.1} parent=27 // pred_region
          %194 = dma.done %s187, 64
        $region32: #{tpu_custom_call.1} parent=27 // pred_fallthru
          _
        %s195 = sand.u32 %s79, 1
        %s196 = scalar_lea.sflag [#allocation7], %s195
        %s197 = sand.u32 %s79, 1
        %s198 = smul.addr %s197, 8
        %s199 = scalar_lea.vmem [#allocation6], %s198
        // Predicated region
        $region33: #{tpu_custom_call.1} parent=27 // pred_check
          %p200 = pneg %p92
        $region34: #{tpu_custom_call.1} parent=27 // pred_check_branch
          %202 = sbr.rel (%p200) target = $region36
        $region35: #{tpu_custom_call.1} parent=27 // pred_region
          %203 = dma.done %s196, 128
        $region36: #{tpu_custom_call.1} parent=27 // pred_fallthru
          _
        %s204 = sand.u32 %s51, 1
        %s205 = scalar_lea.sflag [#allocation4], %s204
        %s206 = sand.u32 %s51, 1
        %s207 = smul.addr %s206, 4
        %s208 = scalar_lea.vmem [#allocation3], %s207
        %p209 = pneg %p64
        %p210 = pneg %p61
        %s211 = sand.u32 %s79, 1
        %s212 = scalar_lea.sflag [#allocation7], %s211
        %s213 = sand.u32 %s79, 1
        %s214 = smul.addr %s213, 8
        %s215 = scalar_lea.vmem [#allocation6], %s214
        %p216 = pneg %p92
        %p217 = pneg %p89
        %p218 = pneg %p120
        %p219 = pneg %p117
        %s220 = sand.u32 %s107, 1
        %s221 = scalar_lea.sflag [#allocation5], %s220
        %s222 = sand.u32 %s107, 1
        %s223 = scalar_lea.vmem [#allocation8], %s222
        %s224 = smul.u32 2, %s29
        %p225 = scmp.eq.s32.totalorder %s29, 0
        // Predicated region
        $region37: #{tpu_custom_call.1} parent=27 // pred_check
          %p226 = pneg %p225
        $region38: #{tpu_custom_call.1} parent=27 // pred_check_branch
          %228 = sbr.rel (%p226) target = $region40
        $region39: #{tpu_custom_call.1} parent=27 // pred_region
          %229 = vst [vmem:[#allocation2] sm:$0xff] -inf
        $region40: #{tpu_custom_call.1} parent=27 // pred_fallthru
          _
        %v230 = vld [vmem:[%s190] sm:$0xf]
        %v231 = vld [vmem:[%s199] sm:$0xff]
        %v233 = vcombine.high %v231, %v231
        %235 = vxpose.xlu0.b32.start [1/16] %v231, 128
        %236 = vxpose.xlu0.b32.cont [2/16] 0.0, 128
        %237 = vxpose.xlu0.b32.cont [3/16] 0.0, 128
        %238 = vxpose.xlu0.b32.cont [4/16] 0.0, 128
        %239 = vxpose.xlu0.b32.cont [5/16] 0.0, 128
        %240 = vxpose.xlu0.b32.cont [6/16] 0.0, 128
        %241 = vxpose.xlu0.b32.cont [7/16] 0.0, 128
        %242 = vxpose.xlu0.b32.cont [8/16] 0.0, 128
        %243 = vxpose.xlu0.b32.cont [9/16] 0.0, 128
        %244 = vxpose.xlu0.b32.cont [10/16] 0.0, 128
        %245 = vxpose.xlu0.b32.cont [11/16] 0.0, 128
        %246 = vxpose.xlu0.b32.cont [12/16] 0.0, 128
        %247 = vxpose.xlu0.b32.cont [13/16] 0.0, 128
        %248 = vxpose.xlu0.b32.cont [14/16] 0.0, 128
        %249 = vxpose.xlu0.b32.cont [15/16] 0.0, 128
        %250 = vxpose.xlu0.b32.end [16/16] 0.0, 128
        %v251 = vpop.trf.xlu0
        %v252 = vpop.trf.xlu0
        %v253 = vpop.trf.xlu0
        %v254 = vpop.trf.xlu0
        %v255 = vpop.trf.xlu0
        %v256 = vpop.trf.xlu0
        %v257 = vpop.trf.xlu0
        %v258 = vpop.trf.xlu0
        %v259 = vpop.trf.xlu0
        %v260 = vpop.trf.xlu0
        %v261 = vpop.trf.xlu0
        %v262 = vpop.trf.xlu0
        %v263 = vpop.trf.xlu0
        %v264 = vpop.trf.xlu0
        %v265 = vpop.trf.xlu0
        %v266 = vpop.trf.xlu0
        %267 = vxpose.xlu0.b32.start [1/16] %v233, 128
        %268 = vxpose.xlu0.b32.cont [2/16] 0.0, 128
        %269 = vxpose.xlu0.b32.cont [3/16] 0.0, 128
        %270 = vxpose.xlu0.b32.cont [4/16] 0.0, 128
        %271 = vxpose.xlu0.b32.cont [5/16] 0.0, 128
        %272 = vxpose.xlu0.b32.cont [6/16] 0.0, 128
        %273 = vxpose.xlu0.b32.cont [7/16] 0.0, 128
        %274 = vxpose.xlu0.b32.cont [8/16] 0.0, 128
        %275 = vxpose.xlu0.b32.cont [9/16] 0.0, 128
        %276 = vxpose.xlu0.b32.cont [10/16] 0.0, 128
        %277 = vxpose.xlu0.b32.cont [11/16] 0.0, 128
        %278 = vxpose.xlu0.b32.cont [12/16] 0.0, 128
        %279 = vxpose.xlu0.b32.cont [13/16] 0.0, 128
        %280 = vxpose.xlu0.b32.cont [14/16] 0.0, 128
        %281 = vxpose.xlu0.b32.cont [15/16] 0.0, 128
        %282 = vxpose.xlu0.b32.end [16/16] 0.0, 128
        %v283 = vpop.trf.xlu0
        %v284 = vpop.trf.xlu0
        %v285 = vpop.trf.xlu0
        %v286 = vpop.trf.xlu0
        %v287 = vpop.trf.xlu0
        %v288 = vpop.trf.xlu0
        %v289 = vpop.trf.xlu0
        %v290 = vpop.trf.xlu0
        %v291 = vpop.trf.xlu0
        %v292 = vpop.trf.xlu0
        %v293 = vpop.trf.xlu0
        %v294 = vpop.trf.xlu0
        %v295 = vpop.trf.xlu0
        %v296 = vpop.trf.xlu0
        %v297 = vpop.trf.xlu0
        %v298 = vpop.trf.xlu0
        %vm299 = vcmask 31744
        %v301 = vsel %vm299, %v251, 0
        %v304 = vsel %vm299, %v252, 0
        %v307 = vsel %vm299, %v253, 0
        %v310 = vsel %vm299, %v254, 0
        %v313 = vsel %vm299, %v255, 0
        %v316 = vsel %vm299, %v256, 0
        %v319 = vsel %vm299, %v257, 0
        %v322 = vsel %vm299, %v258, 0
        %v325 = vsel %vm299, %v259, 0
        %v328 = vsel %vm299, %v260, 0
        %v331 = vsel %vm299, %v261, 0
        %v334 = vsel %vm299, %v262, 0
        %v337 = vsel %vm299, %v263, 0
        %v340 = vsel %vm299, %v264, 0
        %v343 = vsel %vm299, %v265, 0
        %v346 = vsel %vm299, %v266, 0
        %v349 = vsel %vm299, %v283, 0
        %v352 = vsel %vm299, %v284, 0
        %v355 = vsel %vm299, %v285, 0
        %v358 = vsel %vm299, %v286, 0
        %v361 = vsel %vm299, %v287, 0
        %v364 = vsel %vm299, %v288, 0
        %v367 = vsel %vm299, %v289, 0
        %v370 = vsel %vm299, %v290, 0
        %v373 = vsel %vm299, %v291, 0
        %v376 = vsel %vm299, %v292, 0
        %v379 = vsel %vm299, %v293, 0
        %v382 = vsel %vm299, %v294, 0
        %v385 = vsel %vm299, %v295, 0
        %v388 = vsel %vm299, %v296, 0
        %v391 = vsel %vm299, %v297, 0
        %v394 = vsel %vm299, %v298, 0
        %vm396 = vcmask 1043456
        %v398 = vsel %vm396, %v230, 0
        %400 = vmatprep.subr.mxu0 0.0
        %401 = vmatpush1.msra.mxu0 0.0
        %402 = vmatprep.subr.mxu0 0.0
        %403 = vmatpush1.msra.mxu0 0.0
        %404 = vmatprep.subr.mxu0 0.0
        %405 = vmatpush1.msra.mxu0 0.0
        %406 = vmatprep.subr.mxu0 0.0
        %407 = vmatpush1.msra.mxu0 0.0
        %408 = vmatprep.subr.mxu0 0.0
        %409 = vmatpush1.msra.mxu0 0.0
        %410 = vmatprep.subr.mxu0 0.0
        %411 = vmatpush1.msra.mxu0 0.0
        %412 = vmatprep.subr.mxu0 0.0
        %413 = vmatpush1.msra.mxu0 0.0
        %414 = vmatprep.subr.mxu0 0.0
        %415 = vmatpush1.msra.mxu0 0.0
        %416 = vmatprep.subr.mxu0 0.0
        %417 = vmatpush1.msra.mxu0 0.0
        %418 = vmatprep.subr.mxu0 0.0
        %419 = vmatpush1.msra.mxu0 0.0
        %420 = vmatprep.subr.mxu0 0.0
        %421 = vmatpush1.msra.mxu0 0.0
        %422 = vmatprep.subr.mxu0 0.0
        %423 = vmatpush1.msra.mxu0 0.0
        %424 = vmatprep.subr.mxu0 0.0
        %425 = vmatpush1.msra.mxu0 0.0
        %426 = vmatprep.subr.mxu0 0.0
        %427 = vmatpush1.msra.mxu0 0.0
        %428 = vmatprep.subr.mxu0 0.0
        %429 = vmatpush1.msra.mxu0 0.0
        %430 = vmatprep.subr.mxu0 0.0
        %431 = vmatpush1.msra.mxu0 %v398
        %432 = vmatprep.subr.mxu0 0.0
        %433 = vmatpush2.msra.mxu0 0.0
        %434 = vmatprep.subr.mxu0 0.0
        %435 = vmatpush2.msra.mxu0 0.0
        %436 = vmatprep.subr.mxu0 0.0
        %437 = vmatpush2.msra.mxu0 0.0
        %438 = vmatprep.subr.mxu0 0.0
        %439 = vmatpush2.msra.mxu0 0.0
        %440 = vmatprep.subr.mxu0 0.0
        %441 = vmatpush2.msra.mxu0 0.0
        %442 = vmatprep.subr.mxu0 0.0
        %443 = vmatpush2.msra.mxu0 0.0
        %444 = vmatprep.subr.mxu0 0.0
        %445 = vmatpush2.msra.mxu0 0.0
        %446 = vmatprep.subr.mxu0 0.0
        %447 = vmatpush2.msra.mxu0 0.0
        %448 = vmatprep.subr.mxu0 0.0
        %449 = vmatpush2.msra.mxu0 0.0
        %450 = vmatprep.subr.mxu0 0.0
        %451 = vmatpush2.msra.mxu0 0.0
        %452 = vmatprep.subr.mxu0 0.0
        %453 = vmatpush2.msra.mxu0 0.0
        %454 = vmatprep.subr.mxu0 0.0
        %455 = vmatpush2.msra.mxu0 0.0
        %456 = vmatprep.subr.mxu0 0.0
        %457 = vmatpush2.msra.mxu0 0.0
        %458 = vmatprep.subr.mxu0 0.0
        %459 = vmatpush2.msra.mxu0 0.0
        %460 = vmatprep.subr.mxu0 0.0
        %461 = vmatpush2.msra.mxu0 0.0
        %462 = vmatprep.subr.mxu0 0.0
        %463 = vmatpush2.msra.mxu0 0.0
        %464 = vmatprep.mubr.f32.mxu0 0.0
        %465 = vmatmul.mubr.f32.gmra.mxu0 %v301
        %v466 = vpop.f32.mrf.mxu0
        %v467 = vadd.f32 0.0, %v466
        %v468 = vpop.f32.mrf.mxu0
        %469 = vmatprep.mubr.f32.mxu0 0.0
        %470 = vmatmul.mubr.f32.gmra.mxu0 %v304
        %v471 = vpop.f32.mrf.mxu0
        %v472 = vadd.f32 0.0, %v471
        %v473 = vpop.f32.mrf.mxu0
        %474 = vmatprep.mubr.f32.mxu0 0.0
        %475 = vmatmul.mubr.f32.gmra.mxu0 %v307
        %v476 = vpop.f32.mrf.mxu0
        %v477 = vadd.f32 0.0, %v476
        %v478 = vpop.f32.mrf.mxu0
        %479 = vmatprep.mubr.f32.mxu0 0.0
        %480 = vmatmul.mubr.f32.gmra.mxu0 %v310
        %v481 = vpop.f32.mrf.mxu0
        %v482 = vadd.f32 0.0, %v481
        %v483 = vpop.f32.mrf.mxu0
        %484 = vmatprep.mubr.f32.mxu0 0.0
        %485 = vmatmul.mubr.f32.gmra.mxu0 %v313
        %v486 = vpop.f32.mrf.mxu0
        %v487 = vadd.f32 0.0, %v486
        %v488 = vpop.f32.mrf.mxu0
        %489 = vmatprep.mubr.f32.mxu0 0.0
        %490 = vmatmul.mubr.f32.gmra.mxu0 %v316
        %v491 = vpop.f32.mrf.mxu0
        %v492 = vadd.f32 0.0, %v491
        %v493 = vpop.f32.mrf.mxu0
        %494 = vmatprep.mubr.f32.mxu0 0.0
        %495 = vmatmul.mubr.f32.gmra.mxu0 %v319
        %v496 = vpop.f32.mrf.mxu0
        %v497 = vadd.f32 0.0, %v496
        %v498 = vpop.f32.mrf.mxu0
        %499 = vmatprep.mubr.f32.mxu0 0.0
        %500 = vmatmul.mubr.f32.gmra.mxu0 %v322
        %v501 = vpop.f32.mrf.mxu0
        %v502 = vadd.f32 0.0, %v501
        %v503 = vpop.f32.mrf.mxu0
        %504 = vmatprep.mubr.f32.mxu0 0.0
        %505 = vmatmul.mubr.f32.gmra.mxu0 %v325
        %v506 = vpop.f32.mrf.mxu0
        %v507 = vadd.f32 0.0, %v506
        %v508 = vpop.f32.mrf.mxu0
        %509 = vmatprep.mubr.f32.mxu0 0.0
        %510 = vmatmul.mubr.f32.gmra.mxu0 %v328
        %v511 = vpop.f32.mrf.mxu0
        %v512 = vadd.f32 0.0, %v511
        %v513 = vpop.f32.mrf.mxu0
        %514 = vmatprep.mubr.f32.mxu0 0.0
        %515 = vmatmul.mubr.f32.gmra.mxu0 %v331
        %v516 = vpop.f32.mrf.mxu0
        %v517 = vadd.f32 0.0, %v516
        %v518 = vpop.f32.mrf.mxu0
        %519 = vmatprep.mubr.f32.mxu0 0.0
        %520 = vmatmul.mubr.f32.gmra.mxu0 %v334
        %v521 = vpop.f32.mrf.mxu0
        %v522 = vadd.f32 0.0, %v521
        %v523 = vpop.f32.mrf.mxu0
        %524 = vmatprep.mubr.f32.mxu0 0.0
        %525 = vmatmul.mubr.f32.gmra.mxu0 %v337
        %v526 = vpop.f32.mrf.mxu0
        %v527 = vadd.f32 0.0, %v526
        %v528 = vpop.f32.mrf.mxu0
        %529 = vmatprep.mubr.f32.mxu0 0.0
        %530 = vmatmul.mubr.f32.gmra.mxu0 %v340
        %v531 = vpop.f32.mrf.mxu0
        %v532 = vadd.f32 0.0, %v531
        %v533 = vpop.f32.mrf.mxu0
        %534 = vmatprep.mubr.f32.mxu0 0.0
        %535 = vmatmul.mubr.f32.gmra.mxu0 %v343
        %v536 = vpop.f32.mrf.mxu0
        %v537 = vadd.f32 0.0, %v536
        %v538 = vpop.f32.mrf.mxu0
        %539 = vmatprep.mubr.f32.mxu0 0.0
        %540 = vmatmul.mubr.f32.gmra.mxu0 %v346
        %v541 = vpop.f32.mrf.mxu0
        %v542 = vadd.f32 0.0, %v541
        %v543 = vpop.f32.mrf.mxu0
        %544 = vmatprep.mubr.f32.mxu0 0.0
        %545 = vmatmul.mubr.f32.gmra.mxu0 %v349
        %v546 = vpop.f32.mrf.mxu0
        %v547 = vadd.f32 0.0, %v546
        %v548 = vpop.f32.mrf.mxu0
        %549 = vmatprep.mubr.f32.mxu0 0.0
        %550 = vmatmul.mubr.f32.gmra.mxu0 %v352
        %v551 = vpop.f32.mrf.mxu0
        %v552 = vadd.f32 0.0, %v551
        %v553 = vpop.f32.mrf.mxu0
        %554 = vmatprep.mubr.f32.mxu0 0.0
        %555 = vmatmul.mubr.f32.gmra.mxu0 %v355
        %v556 = vpop.f32.mrf.mxu0
        %v557 = vadd.f32 0.0, %v556
        %v558 = vpop.f32.mrf.mxu0
        %559 = vmatprep.mubr.f32.mxu0 0.0
        %560 = vmatmul.mubr.f32.gmra.mxu0 %v358
        %v561 = vpop.f32.mrf.mxu0
        %v562 = vadd.f32 0.0, %v561
        %v563 = vpop.f32.mrf.mxu0
        %564 = vmatprep.mubr.f32.mxu0 0.0
        %565 = vmatmul.mubr.f32.gmra.mxu0 %v361
        %v566 = vpop.f32.mrf.mxu0
        %v567 = vadd.f32 0.0, %v566
        %v568 = vpop.f32.mrf.mxu0
        %569 = vmatprep.mubr.f32.mxu0 0.0
        %570 = vmatmul.mubr.f32.gmra.mxu0 %v364
        %v571 = vpop.f32.mrf.mxu0
        %v572 = vadd.f32 0.0, %v571
        %v573 = vpop.f32.mrf.mxu0
        %574 = vmatprep.mubr.f32.mxu0 0.0
        %575 = vmatmul.mubr.f32.gmra.mxu0 %v367
        %v576 = vpop.f32.mrf.mxu0
        %v577 = vadd.f32 0.0, %v576
        %v578 = vpop.f32.mrf.mxu0
        %579 = vmatprep.mubr.f32.mxu0 0.0
        %580 = vmatmul.mubr.f32.gmra.mxu0 %v370
        %v581 = vpop.f32.mrf.mxu0
        %v582 = vadd.f32 0.0, %v581
        %v583 = vpop.f32.mrf.mxu0
        %584 = vmatprep.mubr.f32.mxu0 0.0
        %585 = vmatmul.mubr.f32.gmra.mxu0 %v373
        %v586 = vpop.f32.mrf.mxu0
        %v587 = vadd.f32 0.0, %v586
        %v588 = vpop.f32.mrf.mxu0
        %589 = vmatprep.mubr.f32.mxu0 0.0
        %590 = vmatmul.mubr.f32.gmra.mxu0 %v376
        %v591 = vpop.f32.mrf.mxu0
        %v592 = vadd.f32 0.0, %v591
        %v593 = vpop.f32.mrf.mxu0
        %594 = vmatprep.mubr.f32.mxu0 0.0
        %595 = vmatmul.mubr.f32.gmra.mxu0 %v379
        %v596 = vpop.f32.mrf.mxu0
        %v597 = vadd.f32 0.0, %v596
        %v598 = vpop.f32.mrf.mxu0
        %599 = vmatprep.mubr.f32.mxu0 0.0
        %600 = vmatmul.mubr.f32.gmra.mxu0 %v382
        %v601 = vpop.f32.mrf.mxu0
        %v602 = vadd.f32 0.0, %v601
        %v603 = vpop.f32.mrf.mxu0
        %604 = vmatprep.mubr.f32.mxu0 0.0
        %605 = vmatmul.mubr.f32.gmra.mxu0 %v385
        %v606 = vpop.f32.mrf.mxu0
        %v607 = vadd.f32 0.0, %v606
        %v608 = vpop.f32.mrf.mxu0
        %609 = vmatprep.mubr.f32.mxu0 0.0
        %610 = vmatmul.mubr.f32.gmra.mxu0 %v388
        %v611 = vpop.f32.mrf.mxu0
        %v612 = vadd.f32 0.0, %v611
        %v613 = vpop.f32.mrf.mxu0
        %614 = vmatprep.mubr.f32.mxu0 0.0
        %615 = vmatmul.mubr.f32.gmra.mxu0 %v391
        %v616 = vpop.f32.mrf.mxu0
        %v617 = vadd.f32 0.0, %v616
        %v618 = vpop.f32.mrf.mxu0
        %619 = vmatprep.mubr.f32.mxu0 0.0
        %620 = vmatmul.mubr.f32.gmra.mxu0 %v394
        %v621 = vpop.f32.mrf.mxu0
        %v622 = vadd.f32 0.0, %v621
        %v623 = vpop.f32.mrf.mxu0
        %624 = vdwg.mxu0
        %v625 = vmax.f32 %v467, %v472
        %v626 = vmax.f32 %v625, %v477
        %v627 = vmax.f32 %v626, %v482
        %v628 = vmax.f32 %v627, %v487
        %v629 = vmax.f32 %v628, %v492
        %v630 = vmax.f32 %v629, %v497
        %v631 = vmax.f32 %v630, %v502
        %v632 = vmax.f32 %v631, %v507
        %v633 = vmax.f32 %v632, %v512
        %v634 = vmax.f32 %v633, %v517
        %v635 = vmax.f32 %v634, %v522
        %v636 = vmax.f32 %v635, %v527
        %v637 = vmax.f32 %v636, %v532
        %v638 = vmax.f32 %v637, %v537
        %v639 = vmax.f32 %v638, %v542
        %v640 = vmax.f32 %v639, %v547
        %v641 = vmax.f32 %v640, %v552
        %v642 = vmax.f32 %v641, %v557
        %v643 = vmax.f32 %v642, %v562
        %v644 = vmax.f32 %v643, %v567
        %v645 = vmax.f32 %v644, %v572
        %v646 = vmax.f32 %v645, %v577
        %v647 = vmax.f32 %v646, %v582
        %v648 = vmax.f32 %v647, %v587
        %v649 = vmax.f32 %v648, %v592
        %v650 = vmax.f32 %v649, %v597
        %v651 = vmax.f32 %v650, %v602
        %v652 = vmax.f32 %v651, %v607
        %v653 = vmax.f32 %v652, %v612
        %v654 = vmax.f32 %v653, %v617
        %v655 = vmax.f32 %v654, %v622
        %v656 = vld [vmem:[#allocation2] sm:$0xff]
        %v657 = vmax.f32 %v656, %v655
        %658 = vst [vmem:[#allocation2] sm:$0xff] %v657
        // Predicated region
        $region41: #{tpu_custom_call.1} parent=27 // pred_check
          %p659 = pneg %p225
        $region42: #{tpu_custom_call.1} parent=27 // pred_check_branch
          %661 = sbr.rel (%p659) target = $region44
        $region43: #{tpu_custom_call.1} parent=27 // pred_region
          %v662 = vld [vmem:[%s190] sm:$0xf]
          %v663 = vmul.f32 %v662, %v662
          %v665 = vrot.slane %v663, 1
          %v667 = vadd.f32 %v663, %v665
          %v668 = vrot.slane %v663, 2
          %v670 = vadd.f32 %v667, %v668
          %v671 = vld [vmem:[#allocation2] sm:$0xff]
          %v672 = vrot.slane %v671, 4
          %v673 = vmax.f32 %v671, %v672
          %v674 = vrot.slane %v673, 2
          %v675 = vmax.f32 %v673, %v674
          %v676 = vrot.slane %v675, 1
          %v677 = vmax.f32 %v675, %v676
          %v678 = vmul.f32 %v677, 2.0
          %v679 = vsub.f32 %v670, %v678
          %v680 = vmax.f32 %v679, 0.0
          %v681 = vrsqrt.pop %v680
          %v682 = vmul.f32 %v680, %v681
          %vm683 = vcmp.eq.f32.partialorder %v680, inf
          %v684 = vsel %vm683, %v680, %v682
          %vm685 = vcmp.eq.f32.partialorder %v680, 0.0
          %v686 = vand.u32 %v680, 2147483648
          %v687 = vsel %vm685, %v686, %v684
          %688 = vst [vmem:[%s223] sm:$0x1] %v687
        $region44: #{tpu_custom_call.1} parent=27 // pred_fallthru
          _
        %s689 = sand.u32 %s107, 1
        %s690 = scalar_lea.sflag [#allocation5], %s689
        %s691 = sand.u32 %s107, 1
        %s692 = scalar_lea.vmem [#allocation8], %s691
        // Predicated region
        $region45: #{tpu_custom_call.1} parent=27 // pred_check
          %p693 = pneg %p117
        $region46: #{tpu_custom_call.1} parent=27 // pred_check_branch
          %695 = sbr.rel (%p693) target = $region48
        $region47: #{tpu_custom_call.1} parent=27 // pred_region
          %s697 = ssub.s32 16, 16
          %698 = vsyncadd %s690, %s697
          %s699 = sadd.s32 %s28, %s27
          %s700 = smul.addr %s699, 16
          %s701 = scalar_lea.hbm %s2, %s700
          %s703 = sshll.u32 %s692, 4
          %s704 = int_to_ptr.vmem [resolvable:$true] %s703
          %706 = dma.vmem_to_hbm [thread:$0]  %s704, 16, %s701, %s690
        $region48: #{tpu_custom_call.1} parent=27 // pred_fallthru
          _
      $region28: #{tpu_custom_call.1} parent=5 // pred_fallthru
        _
      %p707 = scmp.le.s32.totalorder 2, %s17
      // Predicated region
      $region49: #{tpu_custom_call.1} parent=5 // pred_check
        %p708 = pneg %p707
      $region50: #{tpu_custom_call.1} parent=5 // pred_check_branch
        %710 = sbr.rel (%p708) target = $region52
      $region51: #{tpu_custom_call.1} parent=5 // pred_region
        %s711 = ssub.s32 %s17, 2
        // Predicated region
        $region53: #{tpu_custom_call.1} parent=51 // pred_check
          %p712 = pneg %p123
        $region54: #{tpu_custom_call.1} parent=51 // pred_check_branch
          %714 = sbr.rel (%p712) target = $region56
        $region55: #{tpu_custom_call.1} parent=51 // pred_region
          %s715 = sand.u32 %s108, 1
          %s716 = scalar_lea.sflag [#allocation5], %s715
          %s717 = sand.u32 %s108, 1
          %s718 = scalar_lea.vmem [#allocation8], %s717
          %719 = dma.done %s716, 16
        $region56: #{tpu_custom_call.1} parent=51 // pred_fallthru
          _
      $region52: #{tpu_custom_call.1} parent=5 // pred_fallthru
        _
    $region6: #{tpu_custom_call.1} parent=1 // loop_footer
      %s21 = sadd.s32 1, %s17
    $region7: #{tpu_custom_call.1} parent=1 // loop_footer_branch
      %16 = sbr.rel target = $region3
    $region8: #{tpu_custom_call.1} parent=1 // loop_exit
      _
    %720 = vsyncpa [#allocation4], 1
    %s721 = scalar_lea.sflag [#allocation4], 1
    %722 = vsyncpa %s721, 1
    %723 = vsyncpa [#allocation7], 1
    %s724 = scalar_lea.sflag [#allocation7], 1
    %725 = vsyncpa %s724, 1
    %726 = vsyncpa [#allocation5], 1
    %s727 = scalar_lea.sflag [#allocation5], 1
    %728 = vsyncpa %s727, 1

</llo_original>
